<compile_context>
chip_gen: v7x
topology: tpu7x:2x2x1
jax: 0.10.0
libtpu: 0.0.40
codegen_flags: <defaults>
</compile_context>

<pallas_src>
import jax
import jax.numpy as jnp
from jax.experimental import pallas as pl
from jax.experimental.pallas import tpu as pltpu

NUM_GROUPS = 4
MULTIPLIER = 0.75


def eh_fused_kernel(x_ref, w_ref, b_ref, o_ref):
    # x_ref: (tm, Din), w_ref: (Din, tn), b_ref: (1, tn), o_ref: (tm, tn)
    acc = jnp.dot(x_ref[...], w_ref[...], preferred_element_type=jnp.float32)
    o_ref[...] = (acc + b_ref[...]).astype(o_ref.dtype)


def _pick_divisor_tile(dim, candidates):
    for c in candidates:
        if c <= dim and dim % c == 0:
            return c
    return dim


def eh_forward(x, w_org, b_org, w_eh, *, num_groups=NUM_GROUPS, multiplier=MULTIPLIER,
               tm=256, tn=256, compute_dtype=None):
    """x: (B, S, Din); w_org: (Dout, Din); b_org: (Dout,); w_eh: (Dout//G, Din//G)."""
    B, S, Din = x.shape
    Dout, Din2 = w_org.shape
    assert Din2 == Din
    dog, dig = w_eh.shape
    assert dig * num_groups == Din and dog * num_groups == Dout

    cdtype = jnp.dtype(compute_dtype) if compute_dtype is not None else x.dtype
    out_dtype = x.dtype

    # ---- Fold the grouped (block-diagonal) EH weight into the main weight (in f32).
    eye_g = jnp.eye(num_groups, dtype=jnp.float32)
    block_diag_t = jnp.kron(eye_g, jnp.transpose(w_eh).astype(jnp.float32))   # (Din, Dout)
    w_comb_t = (jnp.transpose(w_org).astype(jnp.float32)
                + multiplier * block_diag_t).astype(cdtype)                    # (Din, Dout)
    b2d = b_org.reshape(1, Dout).astype(jnp.float32)

    # ---- Flatten rows and pad M up to a multiple of the row tile.
    M = B * S
    x2d = x.reshape(M, Din).astype(cdtype)

    tn = _pick_divisor_tile(Dout, (tn, 512, 256, 128))
    tm = max(16, tm)                     # bf16 sublane packing needs multiples of 16
    m_pad = pl.cdiv(M, tm) * tm
    if m_pad != M:
        x2d = jnp.pad(x2d, ((0, m_pad - M), (0, 0)))

    grid = (m_pad // tm, Dout // tn)

    # ---- VMEM budget: double-buffered x / w / out tiles (+ bias), clamped for v7x.
    in_sz = jnp.dtype(cdtype).itemsize
    out_sz = jnp.dtype(out_dtype).itemsize
    est = 2 * (tm * Din * in_sz + Din * tn * in_sz + tm * tn * out_sz + tn * 4)
    vmem_limit = int(min(64 * 1024 * 1024, max(32 * 1024 * 1024, 2 * est)))

    out2d = pl.pallas_call(
        eh_fused_kernel,
        out_shape=jax.ShapeDtypeStruct((m_pad, Dout), out_dtype),
        grid_spec=pltpu.PrefetchScalarGridSpec(
            num_scalar_prefetch=0,
            grid=grid,
            in_specs=[
                pl.BlockSpec((tm, Din), lambda i, j: (i, 0)),   # x row tile
                pl.BlockSpec((Din, tn), lambda i, j: (0, j)),   # folded weight column tile
                pl.BlockSpec((1, tn), lambda i, j: (0, j)),     # bias column tile
            ],
            out_specs=pl.BlockSpec((tm, tn), lambda i, j: (i, j)),
        ),
        compiler_params=pltpu.CompilerParams(
            dimension_semantics=("parallel", "parallel"),
            vmem_limit_bytes=vmem_limit,
        ),
    )(x2d, w_comb_t, b2d)

    if m_pad != M:
        out2d = out2d[:M]
    return out2d.reshape(B, S, Dout)


def eh_reference(x, w_org, b_org, w_eh, *, num_groups=NUM_GROUPS, multiplier=MULTIPLIER):
    B, S, Din = x.shape
    y = jnp.einsum("bsi,oi->bso", x, w_org) + b_org
    z = x.reshape(B, S, num_groups, Din // num_groups)
    z = jnp.einsum("bsgi,oi->bsgo", z, w_eh)
    z = z.reshape(B, S, -1)
    return y + z * multiplier


if __name__ == "__main__":
    G = NUM_GROUPS
    Din = 512
    Dout = 512

    key = jax.random.PRNGKey(0)
    kx, kw, kb, ke, kx2 = jax.random.split(key, 5)

    w_org = jax.random.normal(kw, (Dout, Din), dtype=jnp.float32) * 0.02
    b_org = jax.random.normal(kb, (Dout,), dtype=jnp.float32) * 0.1
    # NOTE: the PyTorch __init__ zero-inits the EH weight; use non-zero values here so
    # the folded block-diagonal path is actually exercised.
    w_eh = jax.random.normal(ke, (Dout // G, Din // G), dtype=jnp.float32) * 0.05

    # --- Test 1: f32, M exactly tiles into (tm=256, tn=256) -> grid (2, 2).
    B, S = 2, 256
    x = jax.random.normal(kx, (B, S, Din), dtype=jnp.float32)
    out = jax.block_until_ready(eh_forward(x, w_org, b_org, w_eh))
    ref = eh_reference(x, w_org, b_org, w_eh)
    assert out.shape == (B, S, Dout), out.shape
    assert jnp.allclose(out, ref, atol=2e-4, rtol=2e-4), float(jnp.max(jnp.abs(out - ref)))

    # --- Test 2: small M (exercises the row-padding path).
    B2, S2 = 2, 8
    x_small = jax.random.normal(kx2, (B2, S2, Din), dtype=jnp.float32)
    out_small = jax.block_until_ready(eh_forward(x_small, w_org, b_org, w_eh))
    ref_small = eh_reference(x_small, w_org, b_org, w_eh)
    assert out_small.shape == (B2, S2, Dout)
    assert jnp.allclose(out_small, ref_small, atol=2e-4, rtol=2e-4), \
        float(jnp.max(jnp.abs(out_small - ref_small)))

    # --- Test 3: bf16 MXU operands with f32 accumulation (loose tolerance).
    out_bf16 = jax.block_until_ready(
        eh_forward(x, w_org, b_org, w_eh, compute_dtype=jnp.bfloat16))
    assert jnp.allclose(out_bf16, ref, atol=0.1, rtol=0.05), \
        float(jnp.max(jnp.abs(out_bf16 - ref)))

    print("KERNEL_OK")
</pallas_src>

<mosaic_0001>
module attributes {stable_mosaic.version = 11 : i64} {
  func.func @eh_fused_kernel(%arg0: i32, %arg1: i32, %arg2: memref<256x512xf32, #tpu.memory_space<vmem>>, %arg3: memref<512x256xf32, #tpu.memory_space<vmem>>, %arg4: memref<1x256xf32, #tpu.memory_space<vmem>>, %arg5: memref<256x256xf32, #tpu.memory_space<vmem>>) attributes {dimension_semantics = [#tpu.dimension_semantics<parallel>, #tpu.dimension_semantics<parallel>], iteration_bounds = array<i64: 2, 2>, scalar_prefetch = 0 : i64, scratch_operands = 0 : i64, tpu.core_type = #tpu.core_type<tc>, window_params = [{transform_indices = @transform_0, window_bounds = array<i64: 256, 512>}, {transform_indices = @transform_1, window_bounds = array<i64: 512, 256>}, {transform_indices = @transform_2, window_bounds = array<i64: 1, 256>}, {transform_indices = @transform_3, window_bounds = array<i64: 256, 256>}]} {
    %c0 = arith.constant 0 : index
    %c0_0 = arith.constant 0 : index
    %0 = vector.load %arg2[%c0, %c0_0] : memref<256x512xf32, #tpu.memory_space<vmem>>, vector<256x512xf32>
    %c0_1 = arith.constant 0 : index
    %c0_2 = arith.constant 0 : index
    %1 = vector.load %arg3[%c0_1, %c0_2] : memref<512x256xf32, #tpu.memory_space<vmem>>, vector<512x256xf32>
    %cst = arith.constant dense<0.000000e+00> : vector<256x256xf32>
    %2 = tpu.matmul %0, %1, %cst {dimension_numbers = #tpu.dot_dimension_numbers<[1], [0], [0], [1], [0, 0, 1, 1], [], []>} : vector<256x512xf32>, vector<512x256xf32>, vector<256x256xf32> -> vector<256x256xf32>
    %c0_3 = arith.constant 0 : index
    %c0_4 = arith.constant 0 : index
    %3 = vector.load %arg4[%c0_3, %c0_4] : memref<1x256xf32, #tpu.memory_space<vmem>>, vector<1x256xf32>
    %4 = vector.broadcast %3 : vector<1x256xf32> to vector<256x256xf32>
    %5 = arith.addf %2, %4 : vector<256x256xf32>
    %c0_5 = arith.constant 0 : index
    %c0_6 = arith.constant 0 : index
    %6 = vector.load %arg5[%c0_5, %c0_6] : memref<256x256xf32, #tpu.memory_space<vmem>>, vector<256x256xf32>
    tpu.vector_store %arg5[%c0_5, %c0_6], %5 {strides = array<i32>} : memref<256x256xf32, #tpu.memory_space<vmem>>, vector<256x256xf32>,
    return
  }
  func.func @transform_0(%arg0: i32, %arg1: i32) -> (i32, i32) {
    %c0_i32 = arith.constant 0 : i32
    %c0_i32_0 = arith.constant 0 : i32
    return %arg0, %c0_i32 : i32, i32
  }
  func.func @transform_1(%arg0: i32, %arg1: i32) -> (i32, i32) {
    %c0_i32 = arith.constant 0 : i32
    %c0_i32_0 = arith.constant 0 : i32
    return %c0_i32, %arg1 : i32, i32
  }
  func.func @transform_2(%arg0: i32, %arg1: i32) -> (i32, i32) {
    %c0_i32 = arith.constant 0 : i32
    %c0_i32_0 = arith.constant 0 : i32
    return %c0_i32, %arg1 : i32, i32
  }
  func.func @transform_3(%arg0: i32, %arg1: i32) -> (i32, i32) {
    %c0_i32 = arith.constant 0 : i32
    return %arg0, %arg1 : i32, i32
  }
}

</mosaic_0001>

<llo_original>
// kernel: tpu_custom_call.1
$region0: #{tpu_custom_call.1}
  #allocation0 [shape = 'u32[]', space=smem, size = 0x4, offset = 0x4, fixed_abs, tag = 'smem constant byte address 0x4 - core index']
  #allocation1 [shape = 'u32[144,128]{1,0:T(1,128)}', space=vmem, size = 0x12000, scoped, tag = 'internal scratch']
  %s0 = inlined_call_operand.hbm [shape: f32[512,512], index: 0, kind: input, shape index: {}]
  %s1 = inlined_call_operand.hbm [shape: f32[512,512], index: 1, kind: input, shape index: {}]
  %s2 = inlined_call_operand.vmem [shape: f32[1,512], index: 2, kind: input, shape index: {}]
  %s3 = inlined_call_operand.hbm [shape: f32[512,512], index: 3, kind: output, shape index: {}]
  %s4 = sld [smem:[#allocation0]]
  $region53: #{tpu_custom_call.1} parent=0
    _
  %s6 = ssub.s32 1, %s4
  %s7 = scalar_select 0, %s6, %s4
  $region1: #{tpu_custom_call.1} parent=0
    #allocation2 [shape = 'u8[1048576]{0}', space=vmem, size = 0x100000, scoped, tag = 'input window, operand 0']
    #allocation3 [shape = 's32[2]{0}', space=sflag, size = 0x8, scoped, tag = 'scoped memory for tpu_custom_call.1']
    #allocation4 [shape = 's32[2]{0}', space=sflag, size = 0x8, scoped, tag = 'scoped memory for tpu_custom_call.1']
    #allocation5 [shape = 'u8[1048576]{0}', space=vmem, size = 0x100000, scoped, tag = 'input window, operand 1']
    #allocation6 [shape = 's32[2]{0}', space=sflag, size = 0x8, scoped, tag = 'scoped memory for tpu_custom_call.1']
    #allocation7 [shape = 'u8[524288]{0}', space=vmem, size = 0x80000, scoped, tag = 'output window, operand 0']
    %8 = vsyncpa [#allocation3], 0
    %s9 = scalar_lea.sflag [#allocation3], 1
    %10 = vsyncpa %s9, 0
    %11 = vsyncpa [#allocation6], 0
    %s12 = scalar_lea.sflag [#allocation6], 1
    %13 = vsyncpa %s12, 0
    %14 = vsyncpa [#allocation4], 0
    %s15 = scalar_lea.sflag [#allocation4], 1
    %16 = vsyncpa %s15, 0
    loop: start=0, step=1, limit=6
    $region2: #{tpu_custom_call.1} parent=1 // loop_pre_header
      _
    $region3: #{tpu_custom_call.1} parent=1 // loop_header
      %s18 = sphi 0, %s22
      %p19 = scmp.ge.s32.totalorder %s18, 6
      %s25 = sphi 0, %s37
      %s26 = sphi 0, %s33
      %s27 = sphi 0, %s25
      %s28 = sphi 0, %s26
      %s29 = sphi 0, %s27
      %s30 = sphi 0, %s28
      %s40 = sphi 0, %s42
      %s43 = sphi 0, %s40
      %s44 = sphi 0, %s43
      %s60 = sphi 0, %s44
      %s66 = sphi 0, %s68
      %s69 = sphi 0, %s66
      %s70 = sphi 0, %s69
      %s86 = sphi 0, %s70
      %s92 = sphi 0, %s94
      %s95 = sphi 0, %s92
      %s96 = sphi 0, %s95
      %s112 = sphi 0, %s96
      %s120 = sphi 0, %s122
      %s123 = sphi 0, %s120
      %s124 = sphi 0, %s123
      %s140 = sphi 0, %s124
    $region4: #{tpu_custom_call.1} parent=1 // loop_header_branch
      %21 = sbr.rel (%p19) target = $region8
    $region5: #{tpu_custom_call.1} parent=1 // loop_body
      %s23 = ssub.s32 %s18, 1
      %s24 = ssub.s32 %s18, 2
      %s31 = sadd.s32 1, %s26
      %p32 = scmp.ge.s32.totalorder %s31, 2
      %s33 = scalar_select %p32, 0, %s31
      %s34 = sadd.s32 1, %s25
      %s35 = scalar_select %p32, %s34, %s25
      %p36 = scmp.ge.s32.totalorder %s35, 2
      %s37 = scalar_select %p36, 0, %s35
      %s38 = ssub.s32 %s25, %s37
      %p39 = scmp.eq.s32.totalorder %s38, 0
      %s41 = sadd.s32 %s40, 1
      %s42 = scalar_select %p39, %s40, %s41
      %p45 = pneg %p39
      %p46 = scmp.eq.s32.totalorder %s18, 3
      %p47 = por %p45, %p46
      %p48 = scmp.ne.s32.totalorder %s40, %s43
      %p49 = scmp.eq.s32.totalorder %s18, 0
      %p50 = por %p48, %p49
      %p51 = scmp.ne.s32.totalorder %s40, %s43
      %p52 = scmp.eq.s32.totalorder %s23, 3
      %p53 = por %p51, %p52
      %p54 = scmp.ne.s32.totalorder %s43, %s44
      %p55 = scmp.eq.s32.totalorder %s23, 0
      %p56 = por %p54, %p55
      %p57 = scmp.ne.s32.totalorder %s43, %s44
      %p58 = scmp.eq.s32.totalorder %s24, 3
      %p59 = por %p57, %p58
      %p61 = scmp.ne.s32.totalorder %s44, %s60
      %p62 = scmp.eq.s32.totalorder %s24, 0
      %p63 = por %p61, %p62
      %s64 = ssub.s32 %s26, %s33
      %p65 = scmp.eq.s32.totalorder %s64, 0
      %s67 = sadd.s32 %s66, 1
      %s68 = scalar_select %p65, %s66, %s67
      %p71 = pneg %p65
      %p72 = scmp.eq.s32.totalorder %s18, 3
      %p73 = por %p71, %p72
      %p74 = scmp.ne.s32.totalorder %s66, %s69
      %p75 = scmp.eq.s32.totalorder %s18, 0
      %p76 = por %p74, %p75
      %p77 = scmp.ne.s32.totalorder %s66, %s69
      %p78 = scmp.eq.s32.totalorder %s23, 3
      %p79 = por %p77, %p78
      %p80 = scmp.ne.s32.totalorder %s69, %s70
      %p81 = scmp.eq.s32.totalorder %s23, 0
      %p82 = por %p80, %p81
      %p83 = scmp.ne.s32.totalorder %s69, %s70
      %p84 = scmp.eq.s32.totalorder %s24, 3
      %p85 = por %p83, %p84
      %p87 = scmp.ne.s32.totalorder %s70, %s86
      %p88 = scmp.eq.s32.totalorder %s24, 0
      %p89 = por %p87, %p88
      %s90 = ssub.s32 %s26, %s33
      %p91 = scmp.eq.s32.totalorder %s90, 0
      %s93 = sadd.s32 %s92, 1
      %s94 = scalar_select %p91, %s92, %s93
      %p97 = pneg %p91
      %p98 = scmp.eq.s32.totalorder %s18, 3
      %p99 = por %p97, %p98
      %p100 = scmp.ne.s32.totalorder %s92, %s95
      %p101 = scmp.eq.s32.totalorder %s18, 0
      %p102 = por %p100, %p101
      %p103 = scmp.ne.s32.totalorder %s92, %s95
      %p104 = scmp.eq.s32.totalorder %s23, 3
      %p105 = por %p103, %p104
      %p106 = scmp.ne.s32.totalorder %s95, %s96
      %p107 = scmp.eq.s32.totalorder %s23, 0
      %p108 = por %p106, %p107
      %p109 = scmp.ne.s32.totalorder %s95, %s96
      %p110 = scmp.eq.s32.totalorder %s24, 3
      %p111 = por %p109, %p110
      %p113 = scmp.ne.s32.totalorder %s96, %s112
      %p114 = scmp.eq.s32.totalorder %s24, 0
      %p115 = por %p113, %p114
      %s116 = ssub.s32 %s25, %s37
      %s117 = ssub.s32 %s26, %s33
      %s118 = sor.u32 %s116, %s117
      %p119 = scmp.eq.s32.totalorder %s118, 0
      %s121 = sadd.s32 %s120, 1
      %s122 = scalar_select %p119, %s120, %s121
      %p125 = pneg %p119
      %p126 = scmp.eq.s32.totalorder %s18, 3
      %p127 = por %p125, %p126
      %p128 = scmp.ne.s32.totalorder %s120, %s123
      %p129 = scmp.eq.s32.totalorder %s18, 0
      %p130 = por %p128, %p129
      %p131 = scmp.ne.s32.totalorder %s120, %s123
      %p132 = scmp.eq.s32.totalorder %s23, 3
      %p133 = por %p131, %p132
      %p134 = scmp.ne.s32.totalorder %s123, %s124
      %p135 = scmp.eq.s32.totalorder %s23, 0
      %p136 = por %p134, %p135
      %p137 = scmp.ne.s32.totalorder %s123, %s124
      %p138 = scmp.eq.s32.totalorder %s24, 3
      %p139 = por %p137, %p138
      %p141 = scmp.ne.s32.totalorder %s124, %s140
      %p142 = scmp.eq.s32.totalorder %s24, 0
      %p143 = por %p141, %p142
      %p144 = scmp.le.s32.totalorder 1, %s18
      %p145 = scmp.lt.s32.totalorder %s18, 5
      %p146 = pnand %p144, %p145
      %p147 = pneg %p146
      // Predicated region
      $region9: #{tpu_custom_call.1} parent=5 // pred_check
        _
      $region10: #{tpu_custom_call.1} parent=5 // pred_check_branch
        %149 = sbr.rel (%p146) target = $region12
      $region11: #{tpu_custom_call.1} parent=5 // pred_region
        %s150 = ssub.s32 %s18, 1
      $region12: #{tpu_custom_call.1} parent=5 // pred_fallthru
        _
      %p151 = scmp.lt.s32.totalorder %s18, 4
      // Predicated region
      $region13: #{tpu_custom_call.1} parent=5 // pred_check
        %p152 = pneg %p151
      $region14: #{tpu_custom_call.1} parent=5 // pred_check_branch
        %154 = sbr.rel (%p152) target = $region16
      $region15: #{tpu_custom_call.1} parent=5 // pred_region
        // Predicated region
        $region17: #{tpu_custom_call.1} parent=15 // pred_check
          %p155 = pneg %p50
        $region18: #{tpu_custom_call.1} parent=15 // pred_check_branch
          %157 = sbr.rel (%p155) target = $region20
        $region19: #{tpu_custom_call.1} parent=15 // pred_region
          %s158 = sand.u32 %s40, 1
          %s159 = scalar_lea.sflag [#allocation3], %s158
          %s160 = sand.u32 %s40, 1
          %s161 = smul.addr %s160, 1024
          %s162 = scalar_lea.vmem [#allocation2], %s161
          %s163 = smul.u32 32, %s25
          %s165 = ssub.s32 16384, 16384
          %166 = vsyncadd %s159, %s165
          %s167 = smul.addr %s163, 4
          %s168 = smul.addr %s167, 128
          %s169 = scalar_lea.hbm %s0, %s168
          %s170 = sshll.u32 %s162, 4
          %s171 = int_to_ptr.vmem [resolvable:$true] %s170
          %176 = dma.hbm_to_vmem [thread:$0]  %s169, 16384, %s171, %s159, 512, 512, 32
        $region20: #{tpu_custom_call.1} parent=15 // pred_fallthru
          _
        // Predicated region
        $region21: #{tpu_custom_call.1} parent=15 // pred_check
          %p177 = pneg %p76
        $region22: #{tpu_custom_call.1} parent=15 // pred_check_branch
          %179 = sbr.rel (%p177) target = $region24
        $region23: #{tpu_custom_call.1} parent=15 // pred_region
          %s180 = sand.u32 %s66, 1
          %s181 = scalar_lea.sflag [#allocation6], %s180
          %s182 = sand.u32 %s66, 1
          %s183 = smul.addr %s182, 1024
          %s184 = scalar_lea.vmem [#allocation5], %s183
          %s185 = smul.u32 2, %s26
          %s187 = ssub.s32 16384, 16384
          %188 = vsyncadd %s181, %s187
          %s189 = smul.addr %s185, 128
          %s190 = scalar_lea.hbm %s1, %s189
          %s191 = sshll.u32 %s184, 4
          %s192 = int_to_ptr.vmem [resolvable:$true] %s191
          %197 = dma.hbm_to_vmem [thread:$0]  %s190, 16384, %s192, %s181, 512, 256, 16
        $region24: #{tpu_custom_call.1} parent=15 // pred_fallthru
          _
        // Predicated region
        $region25: #{tpu_custom_call.1} parent=15 // pred_check
          %p198 = pneg %p102
        $region26: #{tpu_custom_call.1} parent=15 // pred_check_branch
          %200 = sbr.rel (%p198) target = $region28
        $region27: #{tpu_custom_call.1} parent=15 // pred_region
          %s201 = smul.u32 2, %s26
          %p202 = scmp.lt.s32.totalorder %s201, 3
          %s203 = scalar_select %p202, %s201, 3
          %s204 = scalar_lea.vmem %s2, %s203
          %s205 = smul.u32 2, %s26
        $region28: #{tpu_custom_call.1} parent=15 // pred_fallthru
          _
      $region16: #{tpu_custom_call.1} parent=5 // pred_fallthru
        _
      %p206 = scmp.le.s32.totalorder 1, %s18
      %p207 = scmp.lt.s32.totalorder %s18, 5
      %p208 = pnand %p206, %p207
      %p209 = pneg %p208
      // Predicated region
      $region29: #{tpu_custom_call.1} parent=5 // pred_check
        _
      $region30: #{tpu_custom_call.1} parent=5 // pred_check_branch
        %211 = sbr.rel (%p208) target = $region32
      $region31: #{tpu_custom_call.1} parent=5 // pred_region
        %s212 = ssub.s32 %s18, 1
        %s213 = sand.u32 %s43, 1
        %s214 = scalar_lea.sflag [#allocation3], %s213
        %s215 = sand.u32 %s43, 1
        %s216 = smul.addr %s215, 1024
        %s217 = scalar_lea.vmem [#allocation2], %s216
        // Predicated region
        $region33: #{tpu_custom_call.1} parent=31 // pred_check
          %p218 = pneg %p56
        $region34: #{tpu_custom_call.1} parent=31 // pred_check_branch
          %220 = sbr.rel (%p218) target = $region36
        $region35: #{tpu_custom_call.1} parent=31 // pred_region
          %221 = dma.done %s214, 16384
        $region36: #{tpu_custom_call.1} parent=31 // pred_fallthru
          _
        %s222 = sand.u32 %s69, 1
        %s223 = scalar_lea.sflag [#allocation6], %s222
        %s224 = sand.u32 %s69, 1
        %s225 = smul.addr %s224, 1024
        %s226 = scalar_lea.vmem [#allocation5], %s225
        // Predicated region
        $region37: #{tpu_custom_call.1} parent=31 // pred_check
          %p227 = pneg %p82
        $region38: #{tpu_custom_call.1} parent=31 // pred_check_branch
          %229 = sbr.rel (%p227) target = $region40
        $region39: #{tpu_custom_call.1} parent=31 // pred_region
          %230 = dma.done %s223, 16384
        $region40: #{tpu_custom_call.1} parent=31 // pred_fallthru
          _
        %s231 = sand.u32 %s43, 1
        %s232 = scalar_lea.sflag [#allocation3], %s231
        %s233 = sand.u32 %s43, 1
        %s234 = smul.addr %s233, 1024
        %s235 = scalar_lea.vmem [#allocation2], %s234
        %p236 = pneg %p56
        %p237 = pneg %p53
        %s238 = sand.u32 %s69, 1
        %s239 = scalar_lea.sflag [#allocation6], %s238
        %s240 = sand.u32 %s69, 1
        %s241 = smul.addr %s240, 1024
        %s242 = scalar_lea.vmem [#allocation5], %s241
        %p243 = pneg %p82
        %p244 = pneg %p79
        %s245 = smul.u32 2, %s28
        %p246 = scmp.lt.s32.totalorder %s245, 3
        %s247 = scalar_select %p246, %s245, 3
        %s248 = scalar_lea.vmem %s2, %s247
        %p249 = pneg %p108
        %p250 = pneg %p105
        %p251 = pneg %p136
        %p252 = pneg %p133
        %s253 = sand.u32 %s123, 1
        %s254 = scalar_lea.sflag [#allocation4], %s253
        %s255 = sand.u32 %s123, 1
        %s256 = smul.addr %s255, 512
        %s257 = scalar_lea.vmem [#allocation7], %s256
        %s258 = smul.u32 32, %s27
        %s259 = smul.u32 2, %s28
        %s260 = smul.u32 2, %s28
        %p261 = scmp.lt.s32.totalorder %s260, 3
        %s262 = scalar_select %p261, %s260, 3
        %s263 = scalar_lea.vmem %s2, %s262
        %s264 = smul.u32 2, %s28
        %s265 = smul.u32 32, %s27
        %s266 = smul.u32 2, %s28
        %v267 = vld [vmem:[%s217] sm:$0xff]
        %v268 = vld [vmem:[%s217 + $0x8] sm:$0xff]
        %v269 = vld [vmem:[%s217 + $0x10] sm:$0xff]
        %v270 = vld [vmem:[%s217 + $0x18] sm:$0xff]
        %v271 = vld [vmem:[%s217 + $0x20] sm:$0xff]
        %v272 = vld [vmem:[%s217 + $0x28] sm:$0xff]
        %v273 = vld [vmem:[%s217 + $0x30] sm:$0xff]
        %v274 = vld [vmem:[%s217 + $0x38] sm:$0xff]
        %v275 = vld [vmem:[%s217 + $0x40] sm:$0xff]
        %v276 = vld [vmem:[%s217 + $0x48] sm:$0xff]
        %v277 = vld [vmem:[%s217 + $0x50] sm:$0xff]
        %v278 = vld [vmem:[%s217 + $0x58] sm:$0xff]
        %v279 = vld [vmem:[%s217 + $0x60] sm:$0xff]
        %v280 = vld [vmem:[%s217 + $0x68] sm:$0xff]
        %v281 = vld [vmem:[%s217 + $0x70] sm:$0xff]
        %v282 = vld [vmem:[%s217 + $0x78] sm:$0xff]
        %v283 = vld [vmem:[%s217 + $0x80] sm:$0xff]
        %v284 = vld [vmem:[%s217 + $0x88] sm:$0xff]
        %v285 = vld [vmem:[%s217 + $0x90] sm:$0xff]
        %v286 = vld [vmem:[%s217 + $0x98] sm:$0xff]
        %v287 = vld [vmem:[%s217 + $0xa0] sm:$0xff]
        %v288 = vld [vmem:[%s217 + $0xa8] sm:$0xff]
        %v289 = vld [vmem:[%s217 + $0xb0] sm:$0xff]
        %v290 = vld [vmem:[%s217 + $0xb8] sm:$0xff]
        %v291 = vld [vmem:[%s217 + $0xc0] sm:$0xff]
        %v292 = vld [vmem:[%s217 + $0xc8] sm:$0xff]
        %v293 = vld [vmem:[%s217 + $0xd0] sm:$0xff]
        %v294 = vld [vmem:[%s217 + $0xd8] sm:$0xff]
        %v295 = vld [vmem:[%s217 + $0xe0] sm:$0xff]
        %v296 = vld [vmem:[%s217 + $0xe8] sm:$0xff]
        %v297 = vld [vmem:[%s217 + $0xf0] sm:$0xff]
        %v298 = vld [vmem:[%s217 + $0xf8] sm:$0xff]
        %v299 = vld [vmem:[%s217 + $0x100] sm:$0xff]
        %v300 = vld [vmem:[%s217 + $0x108] sm:$0xff]
        %v301 = vld [vmem:[%s217 + $0x110] sm:$0xff]
        %v302 = vld [vmem:[%s217 + $0x118] sm:$0xff]
        %v303 = vld [vmem:[%s217 + $0x120] sm:$0xff]
        %v304 = vld [vmem:[%s217 + $0x128] sm:$0xff]
        %v305 = vld [vmem:[%s217 + $0x130] sm:$0xff]
        %v306 = vld [vmem:[%s217 + $0x138] sm:$0xff]
        %v307 = vld [vmem:[%s217 + $0x140] sm:$0xff]
        %v308 = vld [vmem:[%s217 + $0x148] sm:$0xff]
        %v309 = vld [vmem:[%s217 + $0x150] sm:$0xff]
        %v310 = vld [vmem:[%s217 + $0x158] sm:$0xff]
        %v311 = vld [vmem:[%s217 + $0x160] sm:$0xff]
        %v312 = vld [vmem:[%s217 + $0x168] sm:$0xff]
        %v313 = vld [vmem:[%s217 + $0x170] sm:$0xff]
        %v314 = vld [vmem:[%s217 + $0x178] sm:$0xff]
        %v315 = vld [vmem:[%s217 + $0x180] sm:$0xff]
        %v316 = vld [vmem:[%s217 + $0x188] sm:$0xff]
        %v317 = vld [vmem:[%s217 + $0x190] sm:$0xff]
        %v318 = vld [vmem:[%s217 + $0x198] sm:$0xff]
        %v319 = vld [vmem:[%s217 + $0x1a0] sm:$0xff]
        %v320 = vld [vmem:[%s217 + $0x1a8] sm:$0xff]
        %v321 = vld [vmem:[%s217 + $0x1b0] sm:$0xff]
        %v322 = vld [vmem:[%s217 + $0x1b8] sm:$0xff]
        %v323 = vld [vmem:[%s217 + $0x1c0] sm:$0xff]
        %v324 = vld [vmem:[%s217 + $0x1c8] sm:$0xff]
        %v325 = vld [vmem:[%s217 + $0x1d0] sm:$0xff]
        %v326 = vld [vmem:[%s217 + $0x1d8] sm:$0xff]
        %v327 = vld [vmem:[%s217 + $0x1e0] sm:$0xff]
        %v328 = vld [vmem:[%s217 + $0x1e8] sm:$0xff]
        %v329 = vld [vmem:[%s217 + $0x1f0] sm:$0xff]
        %v330 = vld [vmem:[%s217 + $0x1f8] sm:$0xff]
        %v331 = vld [vmem:[%s217 + $0x200] sm:$0xff]
        %v332 = vld [vmem:[%s217 + $0x208] sm:$0xff]
        %v333 = vld [vmem:[%s217 + $0x210] sm:$0xff]
        %v334 = vld [vmem:[%s217 + $0x218] sm:$0xff]
        %v335 = vld [vmem:[%s217 + $0x220] sm:$0xff]
        %v336 = vld [vmem:[%s217 + $0x228] sm:$0xff]
        %v337 = vld [vmem:[%s217 + $0x230] sm:$0xff]
        %v338 = vld [vmem:[%s217 + $0x238] sm:$0xff]
        %v339 = vld [vmem:[%s217 + $0x240] sm:$0xff]
        %v340 = vld [vmem:[%s217 + $0x248] sm:$0xff]
        %v341 = vld [vmem:[%s217 + $0x250] sm:$0xff]
        %v342 = vld [vmem:[%s217 + $0x258] sm:$0xff]
        %v343 = vld [vmem:[%s217 + $0x260] sm:$0xff]
        %v344 = vld [vmem:[%s217 + $0x268] sm:$0xff]
        %v345 = vld [vmem:[%s217 + $0x270] sm:$0xff]
        %v346 = vld [vmem:[%s217 + $0x278] sm:$0xff]
        %v347 = vld [vmem:[%s217 + $0x280] sm:$0xff]
        %v348 = vld [vmem:[%s217 + $0x288] sm:$0xff]
        %v349 = vld [vmem:[%s217 + $0x290] sm:$0xff]
        %v350 = vld [vmem:[%s217 + $0x298] sm:$0xff]
        %v351 = vld [vmem:[%s217 + $0x2a0] sm:$0xff]
        %v352 = vld [vmem:[%s217 + $0x2a8] sm:$0xff]
        %v353 = vld [vmem:[%s217 + $0x2b0] sm:$0xff]
        %v354 = vld [vmem:[%s217 + $0x2b8] sm:$0xff]
        %v355 = vld [vmem:[%s217 + $0x2c0] sm:$0xff]
        %v356 = vld [vmem:[%s217 + $0x2c8] sm:$0xff]
        %v357 = vld [vmem:[%s217 + $0x2d0] sm:$0xff]
        %v358 = vld [vmem:[%s217 + $0x2d8] sm:$0xff]
        %v359 = vld [vmem:[%s217 + $0x2e0] sm:$0xff]
        %v360 = vld [vmem:[%s217 + $0x2e8] sm:$0xff]
        %v361 = vld [vmem:[%s217 + $0x2f0] sm:$0xff]
        %v362 = vld [vmem:[%s217 + $0x2f8] sm:$0xff]
        %v363 = vld [vmem:[%s217 + $0x300] sm:$0xff]
        %v364 = vld [vmem:[%s217 + $0x308] sm:$0xff]
        %v365 = vld [vmem:[%s217 + $0x310] sm:$0xff]
        %v366 = vld [vmem:[%s217 + $0x318] sm:$0xff]
        %v367 = vld [vmem:[%s217 + $0x320] sm:$0xff]
        %v368 = vld [vmem:[%s217 + $0x328] sm:$0xff]
        %v369 = vld [vmem:[%s217 + $0x330] sm:$0xff]
        %v370 = vld [vmem:[%s217 + $0x338] sm:$0xff]
        %v371 = vld [vmem:[%s217 + $0x340] sm:$0xff]
        %v372 = vld [vmem:[%s217 + $0x348] sm:$0xff]
        %v373 = vld [vmem:[%s217 + $0x350] sm:$0xff]
        %v374 = vld [vmem:[%s217 + $0x358] sm:$0xff]
        %v375 = vld [vmem:[%s217 + $0x360] sm:$0xff]
        %v376 = vld [vmem:[%s217 + $0x368] sm:$0xff]
        %v377 = vld [vmem:[%s217 + $0x370] sm:$0xff]
        %v378 = vld [vmem:[%s217 + $0x378] sm:$0xff]
        %v379 = vld [vmem:[%s217 + $0x380] sm:$0xff]
        %v380 = vld [vmem:[%s217 + $0x388] sm:$0xff]
        %v381 = vld [vmem:[%s217 + $0x390] sm:$0xff]
        %v382 = vld [vmem:[%s217 + $0x398] sm:$0xff]
        %v383 = vld [vmem:[%s217 + $0x3a0] sm:$0xff]
        %v384 = vld [vmem:[%s217 + $0x3a8] sm:$0xff]
        %v385 = vld [vmem:[%s217 + $0x3b0] sm:$0xff]
        %v386 = vld [vmem:[%s217 + $0x3b8] sm:$0xff]
        %v387 = vld [vmem:[%s217 + $0x3c0] sm:$0xff]
        %v388 = vld [vmem:[%s217 + $0x3c8] sm:$0xff]
        %v389 = vld [vmem:[%s217 + $0x3d0] sm:$0xff]
        %v390 = vld [vmem:[%s217 + $0x3d8] sm:$0xff]
        %v391 = vld [vmem:[%s217 + $0x3e0] sm:$0xff]
        %v392 = vld [vmem:[%s217 + $0x3e8] sm:$0xff]
        %v393 = vld [vmem:[%s217 + $0x3f0] sm:$0xff]
        %v394 = vld [vmem:[%s217 + $0x3f8] sm:$0xff]
        %v395 = vld [vmem:[%s226] sm:$0xff]
        %v396 = vld [vmem:[%s226 + $0x8] sm:$0xff]
        %v397 = vld [vmem:[%s226 + $0x10] sm:$0xff]
        %v398 = vld [vmem:[%s226 + $0x18] sm:$0xff]
        %v399 = vld [vmem:[%s226 + $0x20] sm:$0xff]
        %v400 = vld [vmem:[%s226 + $0x28] sm:$0xff]
        %v401 = vld [vmem:[%s226 + $0x30] sm:$0xff]
        %v402 = vld [vmem:[%s226 + $0x38] sm:$0xff]
        %v403 = vld [vmem:[%s226 + $0x40] sm:$0xff]
        %v404 = vld [vmem:[%s226 + $0x48] sm:$0xff]
        %v405 = vld [vmem:[%s226 + $0x50] sm:$0xff]
        %v406 = vld [vmem:[%s226 + $0x58] sm:$0xff]
        %v407 = vld [vmem:[%s226 + $0x60] sm:$0xff]
        %v408 = vld [vmem:[%s226 + $0x68] sm:$0xff]
        %v409 = vld [vmem:[%s226 + $0x70] sm:$0xff]
        %v410 = vld [vmem:[%s226 + $0x78] sm:$0xff]
        %v411 = vld [vmem:[%s226 + $0x80] sm:$0xff]
        %v412 = vld [vmem:[%s226 + $0x88] sm:$0xff]
        %v413 = vld [vmem:[%s226 + $0x90] sm:$0xff]
        %v414 = vld [vmem:[%s226 + $0x98] sm:$0xff]
        %v415 = vld [vmem:[%s226 + $0xa0] sm:$0xff]
        %v416 = vld [vmem:[%s226 + $0xa8] sm:$0xff]
        %v417 = vld [vmem:[%s226 + $0xb0] sm:$0xff]
        %v418 = vld [vmem:[%s226 + $0xb8] sm:$0xff]
        %v419 = vld [vmem:[%s226 + $0xc0] sm:$0xff]
        %v420 = vld [vmem:[%s226 + $0xc8] sm:$0xff]
        %v421 = vld [vmem:[%s226 + $0xd0] sm:$0xff]
        %v422 = vld [vmem:[%s226 + $0xd8] sm:$0xff]
        %v423 = vld [vmem:[%s226 + $0xe0] sm:$0xff]
        %v424 = vld [vmem:[%s226 + $0xe8] sm:$0xff]
        %v425 = vld [vmem:[%s226 + $0xf0] sm:$0xff]
        %v426 = vld [vmem:[%s226 + $0xf8] sm:$0xff]
        %v427 = vld [vmem:[%s226 + $0x100] sm:$0xff]
        %v428 = vld [vmem:[%s226 + $0x108] sm:$0xff]
        %v429 = vld [vmem:[%s226 + $0x110] sm:$0xff]
        %v430 = vld [vmem:[%s226 + $0x118] sm:$0xff]
        %v431 = vld [vmem:[%s226 + $0x120] sm:$0xff]
        %v432 = vld [vmem:[%s226 + $0x128] sm:$0xff]
        %v433 = vld [vmem:[%s226 + $0x130] sm:$0xff]
        %v434 = vld [vmem:[%s226 + $0x138] sm:$0xff]
        %v435 = vld [vmem:[%s226 + $0x140] sm:$0xff]
        %v436 = vld [vmem:[%s226 + $0x148] sm:$0xff]
        %v437 = vld [vmem:[%s226 + $0x150] sm:$0xff]
        %v438 = vld [vmem:[%s226 + $0x158] sm:$0xff]
        %v439 = vld [vmem:[%s226 + $0x160] sm:$0xff]
        %v440 = vld [vmem:[%s226 + $0x168] sm:$0xff]
        %v441 = vld [vmem:[%s226 + $0x170] sm:$0xff]
        %v442 = vld [vmem:[%s226 + $0x178] sm:$0xff]
        %v443 = vld [vmem:[%s226 + $0x180] sm:$0xff]
        %v444 = vld [vmem:[%s226 + $0x188] sm:$0xff]
        %v445 = vld [vmem:[%s226 + $0x190] sm:$0xff]
        %v446 = vld [vmem:[%s226 + $0x198] sm:$0xff]
        %v447 = vld [vmem:[%s226 + $0x1a0] sm:$0xff]
        %v448 = vld [vmem:[%s226 + $0x1a8] sm:$0xff]
        %v449 = vld [vmem:[%s226 + $0x1b0] sm:$0xff]
        %v450 = vld [vmem:[%s226 + $0x1b8] sm:$0xff]
        %v451 = vld [vmem:[%s226 + $0x1c0] sm:$0xff]
        %v452 = vld [vmem:[%s226 + $0x1c8] sm:$0xff]
        %v453 = vld [vmem:[%s226 + $0x1d0] sm:$0xff]
        %v454 = vld [vmem:[%s226 + $0x1d8] sm:$0xff]
        %v455 = vld [vmem:[%s226 + $0x1e0] sm:$0xff]
        %v456 = vld [vmem:[%s226 + $0x1e8] sm:$0xff]
        %v457 = vld [vmem:[%s226 + $0x1f0] sm:$0xff]
        %v458 = vld [vmem:[%s226 + $0x1f8] sm:$0xff]
        %v459 = vld [vmem:[%s226 + $0x200] sm:$0xff]
        %v460 = vld [vmem:[%s226 + $0x208] sm:$0xff]
        %v461 = vld [vmem:[%s226 + $0x210] sm:$0xff]
        %v462 = vld [vmem:[%s226 + $0x218] sm:$0xff]
        %v463 = vld [vmem:[%s226 + $0x220] sm:$0xff]
        %v464 = vld [vmem:[%s226 + $0x228] sm:$0xff]
        %v465 = vld [vmem:[%s226 + $0x230] sm:$0xff]
        %v466 = vld [vmem:[%s226 + $0x238] sm:$0xff]
        %v467 = vld [vmem:[%s226 + $0x240] sm:$0xff]
        %v468 = vld [vmem:[%s226 + $0x248] sm:$0xff]
        %v469 = vld [vmem:[%s226 + $0x250] sm:$0xff]
        %v470 = vld [vmem:[%s226 + $0x258] sm:$0xff]
        %v471 = vld [vmem:[%s226 + $0x260] sm:$0xff]
        %v472 = vld [vmem:[%s226 + $0x268] sm:$0xff]
        %v473 = vld [vmem:[%s226 + $0x270] sm:$0xff]
        %v474 = vld [vmem:[%s226 + $0x278] sm:$0xff]
        %v475 = vld [vmem:[%s226 + $0x280] sm:$0xff]
        %v476 = vld [vmem:[%s226 + $0x288] sm:$0xff]
        %v477 = vld [vmem:[%s226 + $0x290] sm:$0xff]
        %v478 = vld [vmem:[%s226 + $0x298] sm:$0xff]
        %v479 = vld [vmem:[%s226 + $0x2a0] sm:$0xff]
        %v480 = vld [vmem:[%s226 + $0x2a8] sm:$0xff]
        %v481 = vld [vmem:[%s226 + $0x2b0] sm:$0xff]
        %v482 = vld [vmem:[%s226 + $0x2b8] sm:$0xff]
        %v483 = vld [vmem:[%s226 + $0x2c0] sm:$0xff]
        %v484 = vld [vmem:[%s226 + $0x2c8] sm:$0xff]
        %v485 = vld [vmem:[%s226 + $0x2d0] sm:$0xff]
        %v486 = vld [vmem:[%s226 + $0x2d8] sm:$0xff]
        %v487 = vld [vmem:[%s226 + $0x2e0] sm:$0xff]
        %v488 = vld [vmem:[%s226 + $0x2e8] sm:$0xff]
        %v489 = vld [vmem:[%s226 + $0x2f0] sm:$0xff]
        %v490 = vld [vmem:[%s226 + $0x2f8] sm:$0xff]
        %v491 = vld [vmem:[%s226 + $0x300] sm:$0xff]
        %v492 = vld [vmem:[%s226 + $0x308] sm:$0xff]
        %v493 = vld [vmem:[%s226 + $0x310] sm:$0xff]
        %v494 = vld [vmem:[%s226 + $0x318] sm:$0xff]
        %v495 = vld [vmem:[%s226 + $0x320] sm:$0xff]
        %v496 = vld [vmem:[%s226 + $0x328] sm:$0xff]
        %v497 = vld [vmem:[%s226 + $0x330] sm:$0xff]
        %v498 = vld [vmem:[%s226 + $0x338] sm:$0xff]
        %v499 = vld [vmem:[%s226 + $0x340] sm:$0xff]
        %v500 = vld [vmem:[%s226 + $0x348] sm:$0xff]
        %v501 = vld [vmem:[%s226 + $0x350] sm:$0xff]
        %v502 = vld [vmem:[%s226 + $0x358] sm:$0xff]
        %v503 = vld [vmem:[%s226 + $0x360] sm:$0xff]
        %v504 = vld [vmem:[%s226 + $0x368] sm:$0xff]
        %v505 = vld [vmem:[%s226 + $0x370] sm:$0xff]
        %v506 = vld [vmem:[%s226 + $0x378] sm:$0xff]
        %v507 = vld [vmem:[%s226 + $0x380] sm:$0xff]
        %v508 = vld [vmem:[%s226 + $0x388] sm:$0xff]
        %v509 = vld [vmem:[%s226 + $0x390] sm:$0xff]
        %v510 = vld [vmem:[%s226 + $0x398] sm:$0xff]
        %v511 = vld [vmem:[%s226 + $0x3a0] sm:$0xff]
        %v512 = vld [vmem:[%s226 + $0x3a8] sm:$0xff]
        %v513 = vld [vmem:[%s226 + $0x3b0] sm:$0xff]
        %v514 = vld [vmem:[%s226 + $0x3b8] sm:$0xff]
        %v515 = vld [vmem:[%s226 + $0x3c0] sm:$0xff]
        %v516 = vld [vmem:[%s226 + $0x3c8] sm:$0xff]
        %v517 = vld [vmem:[%s226 + $0x3d0] sm:$0xff]
        %v518 = vld [vmem:[%s226 + $0x3d8] sm:$0xff]
        %v519 = vld [vmem:[%s226 + $0x3e0] sm:$0xff]
        %v520 = vld [vmem:[%s226 + $0x3e8] sm:$0xff]
        %v521 = vld [vmem:[%s226 + $0x3f0] sm:$0xff]
        %v522 = vld [vmem:[%s226 + $0x3f8] sm:$0xff]
        %v523 = vld [vmem:[%s263] sm:$0x3]
        %v525 = vlaneseq
        %v526 = vshrl.u32 %v525, 7
        %v527 = vsub.s32 0, %v526
        %v528 = vrot.slane %v523, %v527
        %v529 = vlaneseq
        %v530 = vshrl.u32 %v529, 7
        %v531 = vsub.s32 1, %v530
        %v532 = vrot.slane %v523, %v531
        %535 = vmatprep.subr.mxu0 %v396
        %536 = vmatpush1.msra.mxu0 %v395
        %537 = vmatprep.subr.mxu0 %v398
        %538 = vmatpush1.msra.mxu0 %v397
        %539 = vmatprep.subr.mxu0 %v400
        %540 = vmatpush1.msra.mxu0 %v399
        %541 = vmatprep.subr.mxu0 %v402
        %542 = vmatpush1.msra.mxu0 %v401
        %543 = vmatprep.subr.mxu0 %v404
        %544 = vmatpush1.msra.mxu0 %v403
        %545 = vmatprep.subr.mxu0 %v406
        %546 = vmatpush1.msra.mxu0 %v405
        %547 = vmatprep.subr.mxu0 %v408
        %548 = vmatpush1.msra.mxu0 %v407
        %549 = vmatprep.subr.mxu0 %v410
        %550 = vmatpush1.msra.mxu0 %v409
        %551 = vmatprep.subr.mxu0 %v412
        %552 = vmatpush1.msra.mxu0 %v411
        %553 = vmatprep.subr.mxu0 %v414
        %554 = vmatpush1.msra.mxu0 %v413
        %555 = vmatprep.subr.mxu0 %v416
        %556 = vmatpush1.msra.mxu0 %v415
        %557 = vmatprep.subr.mxu0 %v418
        %558 = vmatpush1.msra.mxu0 %v417
        %559 = vmatprep.subr.mxu0 %v420
        %560 = vmatpush1.msra.mxu0 %v419
        %561 = vmatprep.subr.mxu0 %v422
        %562 = vmatpush1.msra.mxu0 %v421
        %563 = vmatprep.subr.mxu0 %v424
        %564 = vmatpush1.msra.mxu0 %v423
        %565 = vmatprep.subr.mxu0 %v426
        %566 = vmatpush1.msra.mxu0 %v425
        %567 = vmatprep.subr.mxu0 %v428
        %568 = vmatpush1.msra.mxu0 %v427
        %569 = vmatprep.subr.mxu0 %v430
        %570 = vmatpush1.msra.mxu0 %v429
        %571 = vmatprep.subr.mxu0 %v432
        %572 = vmatpush1.msra.mxu0 %v431
        %573 = vmatprep.subr.mxu0 %v434
        %574 = vmatpush1.msra.mxu0 %v433
        %575 = vmatprep.subr.mxu0 %v436
        %576 = vmatpush1.msra.mxu0 %v435
        %577 = vmatprep.subr.mxu0 %v438
        %578 = vmatpush1.msra.mxu0 %v437
        %579 = vmatprep.subr.mxu0 %v440
        %580 = vmatpush1.msra.mxu0 %v439
        %581 = vmatprep.subr.mxu0 %v442
        %582 = vmatpush1.msra.mxu0 %v441
        %583 = vmatprep.subr.mxu0 %v444
        %584 = vmatpush1.msra.mxu0 %v443
        %585 = vmatprep.subr.mxu0 %v446
        %586 = vmatpush1.msra.mxu0 %v445
        %587 = vmatprep.subr.mxu0 %v448
        %588 = vmatpush1.msra.mxu0 %v447
        %589 = vmatprep.subr.mxu0 %v450
        %590 = vmatpush1.msra.mxu0 %v449
        %591 = vmatprep.subr.mxu0 %v452
        %592 = vmatpush1.msra.mxu0 %v451
        %593 = vmatprep.subr.mxu0 %v454
        %594 = vmatpush1.msra.mxu0 %v453
        %595 = vmatprep.subr.mxu0 %v456
        %596 = vmatpush1.msra.mxu0 %v455
        %597 = vmatprep.subr.mxu0 %v458
        %598 = vmatpush1.msra.mxu0 %v457
        %599 = vmatprep.mubr.f32.mxu0 %v268
        %600 = vmatmul.mubr.f32.gmra.mrb[0].mxu0 %v267
        %v601 = vpop.f32.mrb[0].mxu0
        %v602 = vadd.f32 %v528, %v601
        %v603 = vpop.f32.mrb[0].mxu0
        %v604 = vadd.f32 %v532, %v603
        %605 = vmatprep.mubr.f32.mxu0 %v272
        %606 = vmatmul.mubr.f32.gmra.mrb[0].mxu0 %v271
        %v607 = vpop.f32.mrb[0].mxu0
        %v608 = vadd.f32 %v528, %v607
        %v609 = vpop.f32.mrb[0].mxu0
        %v610 = vadd.f32 %v532, %v609
        %611 = vmatprep.mubr.f32.mxu0 %v276
        %612 = vmatmul.mubr.f32.gmra.mrb[0].mxu0 %v275
        %v613 = vpop.f32.mrb[0].mxu0
        %v614 = vadd.f32 %v528, %v613
        %v615 = vpop.f32.mrb[0].mxu0
        %v616 = vadd.f32 %v532, %v615
        %617 = vmatprep.mubr.f32.mxu0 %v280
        %618 = vmatmul.mubr.f32.gmra.mrb[0].mxu0 %v279
        %v619 = vpop.f32.mrb[0].mxu0
        %v620 = vadd.f32 %v528, %v619
        %v621 = vpop.f32.mrb[0].mxu0
        %v622 = vadd.f32 %v532, %v621
        %623 = vmatprep.mubr.f32.mxu0 %v284
        %624 = vmatmul.mubr.f32.gmra.mrb[0].mxu0 %v283
        %v625 = vpop.f32.mrb[0].mxu0
        %v626 = vadd.f32 %v528, %v625
        %v627 = vpop.f32.mrb[0].mxu0
        %v628 = vadd.f32 %v532, %v627
        %629 = vmatprep.mubr.f32.mxu0 %v288
        %630 = vmatmul.mubr.f32.gmra.mrb[0].mxu0 %v287
        %v631 = vpop.f32.mrb[0].mxu0
        %v632 = vadd.f32 %v528, %v631
        %v633 = vpop.f32.mrb[0].mxu0
        %v634 = vadd.f32 %v532, %v633
        %635 = vmatprep.mubr.f32.mxu0 %v292
        %636 = vmatmul.mubr.f32.gmra.mrb[0].mxu0 %v291
        %v637 = vpop.f32.mrb[0].mxu0
        %v638 = vadd.f32 %v528, %v637
        %v639 = vpop.f32.mrb[0].mxu0
        %v640 = vadd.f32 %v532, %v639
        %641 = vmatprep.mubr.f32.mxu0 %v296
        %642 = vmatmul.mubr.f32.gmra.mrb[0].mxu0 %v295
        %v643 = vpop.f32.mrb[0].mxu0
        %v644 = vadd.f32 %v528, %v643
        %v645 = vpop.f32.mrb[0].mxu0
        %v646 = vadd.f32 %v532, %v645
        %647 = vmatprep.mubr.f32.mxu0 %v300
        %648 = vmatmul.mubr.f32.gmra.mrb[0].mxu0 %v299
        %v649 = vpop.f32.mrb[0].mxu0
        %v650 = vadd.f32 %v528, %v649
        %v651 = vpop.f32.mrb[0].mxu0
        %v652 = vadd.f32 %v532, %v651
        %653 = vmatprep.mubr.f32.mxu0 %v304
        %654 = vmatmul.mubr.f32.gmra.mrb[0].mxu0 %v303
        %v655 = vpop.f32.mrb[0].mxu0
        %v656 = vadd.f32 %v528, %v655
        %v657 = vpop.f32.mrb[0].mxu0
        %v658 = vadd.f32 %v532, %v657
        %659 = vmatprep.mubr.f32.mxu0 %v308
        %660 = vmatmul.mubr.f32.gmra.mrb[0].mxu0 %v307
        %v661 = vpop.f32.mrb[0].mxu0
        %v662 = vadd.f32 %v528, %v661
        %v663 = vpop.f32.mrb[0].mxu0
        %v664 = vadd.f32 %v532, %v663
        %665 = vmatprep.mubr.f32.mxu0 %v312
        %666 = vmatmul.mubr.f32.gmra.mrb[0].mxu0 %v311
        %v667 = vpop.f32.mrb[0].mxu0
        %v668 = vadd.f32 %v528, %v667
        %v669 = vpop.f32.mrb[0].mxu0
        %v670 = vadd.f32 %v532, %v669
        %671 = vmatprep.mubr.f32.mxu0 %v316
        %672 = vmatmul.mubr.f32.gmra.mrb[0].mxu0 %v315
        %v673 = vpop.f32.mrb[0].mxu0
        %v674 = vadd.f32 %v528, %v673
        %v675 = vpop.f32.mrb[0].mxu0
        %v676 = vadd.f32 %v532, %v675
        %677 = vmatprep.mubr.f32.mxu0 %v320
        %678 = vmatmul.mubr.f32.gmra.mrb[0].mxu0 %v319
        %v679 = vpop.f32.mrb[0].mxu0
        %v680 = vadd.f32 %v528, %v679
        %v681 = vpop.f32.mrb[0].mxu0
        %v682 = vadd.f32 %v532, %v681
        %683 = vmatprep.mubr.f32.mxu0 %v324
        %684 = vmatmul.mubr.f32.gmra.mrb[0].mxu0 %v323
        %v685 = vpop.f32.mrb[0].mxu0
        %v686 = vadd.f32 %v528, %v685
        %v687 = vpop.f32.mrb[0].mxu0
        %v688 = vadd.f32 %v532, %v687
        %689 = vmatprep.mubr.f32.mxu0 %v328
        %690 = vmatmul.mubr.f32.gmra.mrb[0].mxu0 %v327
        %v691 = vpop.f32.mrb[0].mxu0
        %v692 = vadd.f32 %v528, %v691
        %v693 = vpop.f32.mrb[0].mxu0
        %v694 = vadd.f32 %v532, %v693
        %695 = vmatprep.mubr.f32.mxu0 %v332
        %696 = vmatmul.mubr.f32.gmra.mrb[0].mxu0 %v331
        %v697 = vpop.f32.mrb[0].mxu0
        %v698 = vadd.f32 %v528, %v697
        %v699 = vpop.f32.mrb[0].mxu0
        %v700 = vadd.f32 %v532, %v699
        %701 = vmatprep.mubr.f32.mxu0 %v336
        %702 = vmatmul.mubr.f32.gmra.mrb[0].mxu0 %v335
        %v703 = vpop.f32.mrb[0].mxu0
        %v704 = vadd.f32 %v528, %v703
        %v705 = vpop.f32.mrb[0].mxu0
        %v706 = vadd.f32 %v532, %v705
        %707 = vmatprep.mubr.f32.mxu0 %v340
        %708 = vmatmul.mubr.f32.gmra.mrb[0].mxu0 %v339
        %v709 = vpop.f32.mrb[0].mxu0
        %v710 = vadd.f32 %v528, %v709
        %v711 = vpop.f32.mrb[0].mxu0
        %v712 = vadd.f32 %v532, %v711
        %713 = vmatprep.mubr.f32.mxu0 %v344
        %714 = vmatmul.mubr.f32.gmra.mrb[0].mxu0 %v343
        %v715 = vpop.f32.mrb[0].mxu0
        %v716 = vadd.f32 %v528, %v715
        %v717 = vpop.f32.mrb[0].mxu0
        %v718 = vadd.f32 %v532, %v717
        %719 = vmatprep.mubr.f32.mxu0 %v348
        %720 = vmatmul.mubr.f32.gmra.mrb[0].mxu0 %v347
        %v721 = vpop.f32.mrb[0].mxu0
        %v722 = vadd.f32 %v528, %v721
        %v723 = vpop.f32.mrb[0].mxu0
        %v724 = vadd.f32 %v532, %v723
        %725 = vmatprep.mubr.f32.mxu0 %v352
        %726 = vmatmul.mubr.f32.gmra.mrb[0].mxu0 %v351
        %v727 = vpop.f32.mrb[0].mxu0
        %v728 = vadd.f32 %v528, %v727
        %v729 = vpop.f32.mrb[0].mxu0
        %v730 = vadd.f32 %v532, %v729
        %731 = vmatprep.mubr.f32.mxu0 %v356
        %732 = vmatmul.mubr.f32.gmra.mrb[0].mxu0 %v355
        %v733 = vpop.f32.mrb[0].mxu0
        %v734 = vadd.f32 %v528, %v733
        %v735 = vpop.f32.mrb[0].mxu0
        %v736 = vadd.f32 %v532, %v735
        %737 = vmatprep.mubr.f32.mxu0 %v360
        %738 = vmatmul.mubr.f32.gmra.mrb[0].mxu0 %v359
        %v739 = vpop.f32.mrb[0].mxu0
        %v740 = vadd.f32 %v528, %v739
        %v741 = vpop.f32.mrb[0].mxu0
        %v742 = vadd.f32 %v532, %v741
        %743 = vmatprep.mubr.f32.mxu0 %v364
        %744 = vmatmul.mubr.f32.gmra.mrb[0].mxu0 %v363
        %v745 = vpop.f32.mrb[0].mxu0
        %v746 = vadd.f32 %v528, %v745
        %v747 = vpop.f32.mrb[0].mxu0
        %v748 = vadd.f32 %v532, %v747
        %749 = vmatprep.mubr.f32.mxu0 %v368
        %750 = vmatmul.mubr.f32.gmra.mrb[0].mxu0 %v367
        %v751 = vpop.f32.mrb[0].mxu0
        %v752 = vadd.f32 %v528, %v751
        %v753 = vpop.f32.mrb[0].mxu0
        %v754 = vadd.f32 %v532, %v753
        %755 = vmatprep.mubr.f32.mxu0 %v372
        %756 = vmatmul.mubr.f32.gmra.mrb[0].mxu0 %v371
        %v757 = vpop.f32.mrb[0].mxu0
        %v758 = vadd.f32 %v528, %v757
        %v759 = vpop.f32.mrb[0].mxu0
        %v760 = vadd.f32 %v532, %v759
        %761 = vmatprep.mubr.f32.mxu0 %v376
        %762 = vmatmul.mubr.f32.gmra.mrb[0].mxu0 %v375
        %v763 = vpop.f32.mrb[0].mxu0
        %v764 = vadd.f32 %v528, %v763
        %v765 = vpop.f32.mrb[0].mxu0
        %v766 = vadd.f32 %v532, %v765
        %767 = vmatprep.mubr.f32.mxu0 %v380
        %768 = vmatmul.mubr.f32.gmra.mrb[0].mxu0 %v379
        %v769 = vpop.f32.mrb[0].mxu0
        %v770 = vadd.f32 %v528, %v769
        %v771 = vpop.f32.mrb[0].mxu0
        %v772 = vadd.f32 %v532, %v771
        %773 = vmatprep.mubr.f32.mxu0 %v384
        %774 = vmatmul.mubr.f32.gmra.mrb[0].mxu0 %v383
        %v775 = vpop.f32.mrb[0].mxu0
        %v776 = vadd.f32 %v528, %v775
        %v777 = vpop.f32.mrb[0].mxu0
        %v778 = vadd.f32 %v532, %v777
        %779 = vmatprep.mubr.f32.mxu0 %v388
        %780 = vmatmul.mubr.f32.gmra.mrb[0].mxu0 %v387
        %v781 = vpop.f32.mrb[0].mxu0
        %v782 = vadd.f32 %v528, %v781
        %v783 = vpop.f32.mrb[0].mxu0
        %v784 = vadd.f32 %v532, %v783
        %785 = vmatprep.mubr.f32.mxu0 %v392
        %786 = vmatmul.mubr.f32.gmra.mrb[0].mxu0 %v391
        %v787 = vpop.f32.mrb[0].mxu0
        %v788 = vadd.f32 %v528, %v787
        %v789 = vpop.f32.mrb[0].mxu0
        %v790 = vadd.f32 %v532, %v789
        %791 = vdwg.mxu0
        %792 = vmatprep.subr.mxu0 %v460
        %793 = vmatpush1.msra.mxu0 %v459
        %794 = vmatprep.subr.mxu0 %v462
        %795 = vmatpush1.msra.mxu0 %v461
        %796 = vmatprep.subr.mxu0 %v464
        %797 = vmatpush1.msra.mxu0 %v463
        %798 = vmatprep.subr.mxu0 %v466
        %799 = vmatpush1.msra.mxu0 %v465
        %800 = vmatprep.subr.mxu0 %v468
        %801 = vmatpush1.msra.mxu0 %v467
        %802 = vmatprep.subr.mxu0 %v470
        %803 = vmatpush1.msra.mxu0 %v469
        %804 = vmatprep.subr.mxu0 %v472
        %805 = vmatpush1.msra.mxu0 %v471
        %806 = vmatprep.subr.mxu0 %v474
        %807 = vmatpush1.msra.mxu0 %v473
        %808 = vmatprep.subr.mxu0 %v476
        %809 = vmatpush1.msra.mxu0 %v475
        %810 = vmatprep.subr.mxu0 %v478
        %811 = vmatpush1.msra.mxu0 %v477
        %812 = vmatprep.subr.mxu0 %v480
        %813 = vmatpush1.msra.mxu0 %v479
        %814 = vmatprep.subr.mxu0 %v482
        %815 = vmatpush1.msra.mxu0 %v481
        %816 = vmatprep.subr.mxu0 %v484
        %817 = vmatpush1.msra.mxu0 %v483
        %818 = vmatprep.subr.mxu0 %v486
        %819 = vmatpush1.msra.mxu0 %v485
        %820 = vmatprep.subr.mxu0 %v488
        %821 = vmatpush1.msra.mxu0 %v487
        %822 = vmatprep.subr.mxu0 %v490
        %823 = vmatpush1.msra.mxu0 %v489
        %824 = vmatprep.subr.mxu0 %v492
        %825 = vmatpush1.msra.mxu0 %v491
        %826 = vmatprep.subr.mxu0 %v494
        %827 = vmatpush1.msra.mxu0 %v493
        %828 = vmatprep.subr.mxu0 %v496
        %829 = vmatpush1.msra.mxu0 %v495
        %830 = vmatprep.subr.mxu0 %v498
        %831 = vmatpush1.msra.mxu0 %v497
        %832 = vmatprep.subr.mxu0 %v500
        %833 = vmatpush1.msra.mxu0 %v499
        %834 = vmatprep.subr.mxu0 %v502
        %835 = vmatpush1.msra.mxu0 %v501
        %836 = vmatprep.subr.mxu0 %v504
        %837 = vmatpush1.msra.mxu0 %v503
        %838 = vmatprep.subr.mxu0 %v506
        %839 = vmatpush1.msra.mxu0 %v505
        %840 = vmatprep.subr.mxu0 %v508
        %841 = vmatpush1.msra.mxu0 %v507
        %842 = vmatprep.subr.mxu0 %v510
        %843 = vmatpush1.msra.mxu0 %v509
        %844 = vmatprep.subr.mxu0 %v512
        %845 = vmatpush1.msra.mxu0 %v511
        %846 = vmatprep.subr.mxu0 %v514
        %847 = vmatpush1.msra.mxu0 %v513
        %848 = vmatprep.subr.mxu0 %v516
        %849 = vmatpush1.msra.mxu0 %v515
        %850 = vmatprep.subr.mxu0 %v518
        %851 = vmatpush1.msra.mxu0 %v517
        %852 = vmatprep.subr.mxu0 %v520
        %853 = vmatpush1.msra.mxu0 %v519
        %854 = vmatprep.subr.mxu0 %v522
        %855 = vmatpush1.msra.mxu0 %v521
        %856 = vmatprep.mubr.f32.mxu0 %v270
        %857 = vmatmul.mubr.f32.gmra.mrb[0].mxu0 %v269
        %v858 = vpop.f32.mrb[0].mxu0
        %v859 = vadd.f32 %v602, %v858
        %v860 = vpop.f32.mrb[0].mxu0
        %v861 = vadd.f32 %v604, %v860
        %862 = vmatprep.mubr.f32.mxu0 %v274
        %863 = vmatmul.mubr.f32.gmra.mrb[0].mxu0 %v273
        %v864 = vpop.f32.mrb[0].mxu0
        %v865 = vadd.f32 %v608, %v864
        %v866 = vpop.f32.mrb[0].mxu0
        %v867 = vadd.f32 %v610, %v866
        %868 = vmatprep.mubr.f32.mxu0 %v278
        %869 = vmatmul.mubr.f32.gmra.mrb[0].mxu0 %v277
        %v870 = vpop.f32.mrb[0].mxu0
        %v871 = vadd.f32 %v614, %v870
        %v872 = vpop.f32.mrb[0].mxu0
        %v873 = vadd.f32 %v616, %v872
        %874 = vmatprep.mubr.f32.mxu0 %v282
        %875 = vmatmul.mubr.f32.gmra.mrb[0].mxu0 %v281
        %v876 = vpop.f32.mrb[0].mxu0
        %v877 = vadd.f32 %v620, %v876
        %v878 = vpop.f32.mrb[0].mxu0
        %v879 = vadd.f32 %v622, %v878
        %880 = vmatprep.mubr.f32.mxu0 %v286
        %881 = vmatmul.mubr.f32.gmra.mrb[0].mxu0 %v285
        %v882 = vpop.f32.mrb[0].mxu0
        %v883 = vadd.f32 %v626, %v882
        %v884 = vpop.f32.mrb[0].mxu0
        %v885 = vadd.f32 %v628, %v884
        %886 = vmatprep.mubr.f32.mxu0 %v290
        %887 = vmatmul.mubr.f32.gmra.mrb[0].mxu0 %v289
        %v888 = vpop.f32.mrb[0].mxu0
        %v889 = vadd.f32 %v632, %v888
        %v890 = vpop.f32.mrb[0].mxu0
        %v891 = vadd.f32 %v634, %v890
        %892 = vmatprep.mubr.f32.mxu0 %v294
        %893 = vmatmul.mubr.f32.gmra.mrb[0].mxu0 %v293
        %v894 = vpop.f32.mrb[0].mxu0
        %v895 = vadd.f32 %v638, %v894
        %v896 = vpop.f32.mrb[0].mxu0
        %v897 = vadd.f32 %v640, %v896
        %898 = vmatprep.mubr.f32.mxu0 %v298
        %899 = vmatmul.mubr.f32.gmra.mrb[0].mxu0 %v297
        %v900 = vpop.f32.mrb[0].mxu0
        %v901 = vadd.f32 %v644, %v900
        %v902 = vpop.f32.mrb[0].mxu0
        %v903 = vadd.f32 %v646, %v902
        %904 = vmatprep.mubr.f32.mxu0 %v302
        %905 = vmatmul.mubr.f32.gmra.mrb[0].mxu0 %v301
        %v906 = vpop.f32.mrb[0].mxu0
        %v907 = vadd.f32 %v650, %v906
        %v908 = vpop.f32.mrb[0].mxu0
        %v909 = vadd.f32 %v652, %v908
        %910 = vmatprep.mubr.f32.mxu0 %v306
        %911 = vmatmul.mubr.f32.gmra.mrb[0].mxu0 %v305
        %v912 = vpop.f32.mrb[0].mxu0
        %v913 = vadd.f32 %v656, %v912
        %v914 = vpop.f32.mrb[0].mxu0
        %v915 = vadd.f32 %v658, %v914
        %916 = vmatprep.mubr.f32.mxu0 %v310
        %917 = vmatmul.mubr.f32.gmra.mrb[0].mxu0 %v309
        %v918 = vpop.f32.mrb[0].mxu0
        %v919 = vadd.f32 %v662, %v918
        %v920 = vpop.f32.mrb[0].mxu0
        %v921 = vadd.f32 %v664, %v920
        %922 = vmatprep.mubr.f32.mxu0 %v314
        %923 = vmatmul.mubr.f32.gmra.mrb[0].mxu0 %v313
        %v924 = vpop.f32.mrb[0].mxu0
        %v925 = vadd.f32 %v668, %v924
        %v926 = vpop.f32.mrb[0].mxu0
        %v927 = vadd.f32 %v670, %v926
        %928 = vmatprep.mubr.f32.mxu0 %v318
        %929 = vmatmul.mubr.f32.gmra.mrb[0].mxu0 %v317
        %v930 = vpop.f32.mrb[0].mxu0
        %v931 = vadd.f32 %v674, %v930
        %v932 = vpop.f32.mrb[0].mxu0
        %v933 = vadd.f32 %v676, %v932
        %934 = vmatprep.mubr.f32.mxu0 %v322
        %935 = vmatmul.mubr.f32.gmra.mrb[0].mxu0 %v321
        %v936 = vpop.f32.mrb[0].mxu0
        %v937 = vadd.f32 %v680, %v936
        %v938 = vpop.f32.mrb[0].mxu0
        %v939 = vadd.f32 %v682, %v938
        %940 = vmatprep.mubr.f32.mxu0 %v326
        %941 = vmatmul.mubr.f32.gmra.mrb[0].mxu0 %v325
        %v942 = vpop.f32.mrb[0].mxu0
        %v943 = vadd.f32 %v686, %v942
        %v944 = vpop.f32.mrb[0].mxu0
        %v945 = vadd.f32 %v688, %v944
        %946 = vmatprep.mubr.f32.mxu0 %v330
        %947 = vmatmul.mubr.f32.gmra.mrb[0].mxu0 %v329
        %v948 = vpop.f32.mrb[0].mxu0
        %v949 = vadd.f32 %v692, %v948
        %v950 = vpop.f32.mrb[0].mxu0
        %v951 = vadd.f32 %v694, %v950
        %952 = vmatprep.mubr.f32.mxu0 %v334
        %953 = vmatmul.mubr.f32.gmra.mrb[0].mxu0 %v333
        %v954 = vpop.f32.mrb[0].mxu0
        %v955 = vadd.f32 %v698, %v954
        %v956 = vpop.f32.mrb[0].mxu0
        %v957 = vadd.f32 %v700, %v956
        %958 = vmatprep.mubr.f32.mxu0 %v338
        %959 = vmatmul.mubr.f32.gmra.mrb[0].mxu0 %v337
        %v960 = vpop.f32.mrb[0].mxu0
        %v961 = vadd.f32 %v704, %v960
        %v962 = vpop.f32.mrb[0].mxu0
        %v963 = vadd.f32 %v706, %v962
        %964 = vmatprep.mubr.f32.mxu0 %v342
        %965 = vmatmul.mubr.f32.gmra.mrb[0].mxu0 %v341
        %v966 = vpop.f32.mrb[0].mxu0
        %v967 = vadd.f32 %v710, %v966
        %v968 = vpop.f32.mrb[0].mxu0
        %v969 = vadd.f32 %v712, %v968
        %970 = vmatprep.mubr.f32.mxu0 %v346
        %971 = vmatmul.mubr.f32.gmra.mrb[0].mxu0 %v345
        %v972 = vpop.f32.mrb[0].mxu0
        %v973 = vadd.f32 %v716, %v972
        %v974 = vpop.f32.mrb[0].mxu0
        %v975 = vadd.f32 %v718, %v974
        %976 = vmatprep.mubr.f32.mxu0 %v350
        %977 = vmatmul.mubr.f32.gmra.mrb[0].mxu0 %v349
        %v978 = vpop.f32.mrb[0].mxu0
        %v979 = vadd.f32 %v722, %v978
        %v980 = vpop.f32.mrb[0].mxu0
        %v981 = vadd.f32 %v724, %v980
        %982 = vmatprep.mubr.f32.mxu0 %v354
        %983 = vmatmul.mubr.f32.gmra.mrb[0].mxu0 %v353
        %v984 = vpop.f32.mrb[0].mxu0
        %v985 = vadd.f32 %v728, %v984
        %v986 = vpop.f32.mrb[0].mxu0
        %v987 = vadd.f32 %v730, %v986
        %988 = vmatprep.mubr.f32.mxu0 %v358
        %989 = vmatmul.mubr.f32.gmra.mrb[0].mxu0 %v357
        %v990 = vpop.f32.mrb[0].mxu0
        %v991 = vadd.f32 %v734, %v990
        %v992 = vpop.f32.mrb[0].mxu0
        %v993 = vadd.f32 %v736, %v992
        %994 = vmatprep.mubr.f32.mxu0 %v362
        %995 = vmatmul.mubr.f32.gmra.mrb[0].mxu0 %v361
        %v996 = vpop.f32.mrb[0].mxu0
        %v997 = vadd.f32 %v740, %v996
        %v998 = vpop.f32.mrb[0].mxu0
        %v999 = vadd.f32 %v742, %v998
        %1000 = vmatprep.mubr.f32.mxu0 %v366
        %1001 = vmatmul.mubr.f32.gmra.mrb[0].mxu0 %v365
        %v1002 = vpop.f32.mrb[0].mxu0
        %v1003 = vadd.f32 %v746, %v1002
        %v1004 = vpop.f32.mrb[0].mxu0
        %v1005 = vadd.f32 %v748, %v1004
        %1006 = vmatprep.mubr.f32.mxu0 %v370
        %1007 = vmatmul.mubr.f32.gmra.mrb[0].mxu0 %v369
        %v1008 = vpop.f32.mrb[0].mxu0
        %v1009 = vadd.f32 %v752, %v1008
        %v1010 = vpop.f32.mrb[0].mxu0
        %v1011 = vadd.f32 %v754, %v1010
        %1012 = vmatprep.mubr.f32.mxu0 %v374
        %1013 = vmatmul.mubr.f32.gmra.mrb[0].mxu0 %v373
        %v1014 = vpop.f32.mrb[0].mxu0
        %v1015 = vadd.f32 %v758, %v1014
        %v1016 = vpop.f32.mrb[0].mxu0
        %v1017 = vadd.f32 %v760, %v1016
        %1018 = vmatprep.mubr.f32.mxu0 %v378
        %1019 = vmatmul.mubr.f32.gmra.mrb[0].mxu0 %v377
        %v1020 = vpop.f32.mrb[0].mxu0
        %v1021 = vadd.f32 %v764, %v1020
        %v1022 = vpop.f32.mrb[0].mxu0
        %v1023 = vadd.f32 %v766, %v1022
        %1024 = vmatprep.mubr.f32.mxu0 %v382
        %1025 = vmatmul.mubr.f32.gmra.mrb[0].mxu0 %v381
        %v1026 = vpop.f32.mrb[0].mxu0
        %v1027 = vadd.f32 %v770, %v1026
        %v1028 = vpop.f32.mrb[0].mxu0
        %v1029 = vadd.f32 %v772, %v1028
        %1030 = vmatprep.mubr.f32.mxu0 %v386
        %1031 = vmatmul.mubr.f32.gmra.mrb[0].mxu0 %v385
        %v1032 = vpop.f32.mrb[0].mxu0
        %v1033 = vadd.f32 %v776, %v1032
        %v1034 = vpop.f32.mrb[0].mxu0
        %v1035 = vadd.f32 %v778, %v1034
        %1036 = vmatprep.mubr.f32.mxu0 %v390
        %1037 = vmatmul.mubr.f32.gmra.mrb[0].mxu0 %v389
        %v1038 = vpop.f32.mrb[0].mxu0
        %v1039 = vadd.f32 %v782, %v1038
        %v1040 = vpop.f32.mrb[0].mxu0
        %v1041 = vadd.f32 %v784, %v1040
        %1042 = vmatprep.mubr.f32.mxu0 %v394
        %1043 = vmatmul.mubr.f32.gmra.mrb[0].mxu0 %v393
        %v1044 = vpop.f32.mrb[0].mxu0
        %v1045 = vadd.f32 %v788, %v1044
        %v1046 = vpop.f32.mrb[0].mxu0
        %v1047 = vadd.f32 %v790, %v1046
        %1048 = vdwg.mxu0
        %1049 = vst [vmem:[%s257] sm:$0xff] %v859
        %1050 = vst [vmem:[%s257 + $0x8] sm:$0xff] %v861
        %1051 = vst [vmem:[%s257 + $0x10] sm:$0xff] %v865
        %1052 = vst [vmem:[%s257 + $0x18] sm:$0xff] %v867
        %1053 = vst [vmem:[%s257 + $0x20] sm:$0xff] %v871
        %1054 = vst [vmem:[%s257 + $0x28] sm:$0xff] %v873
        %1055 = vst [vmem:[%s257 + $0x30] sm:$0xff] %v877
        %1056 = vst [vmem:[%s257 + $0x38] sm:$0xff] %v879
        %1057 = vst [vmem:[%s257 + $0x40] sm:$0xff] %v883
        %1058 = vst [vmem:[%s257 + $0x48] sm:$0xff] %v885
        %1059 = vst [vmem:[%s257 + $0x50] sm:$0xff] %v889
        %1060 = vst [vmem:[%s257 + $0x58] sm:$0xff] %v891
        %1061 = vst [vmem:[%s257 + $0x60] sm:$0xff] %v895
        %1062 = vst [vmem:[%s257 + $0x68] sm:$0xff] %v897
        %1063 = vst [vmem:[%s257 + $0x70] sm:$0xff] %v901
        %1064 = vst [vmem:[%s257 + $0x78] sm:$0xff] %v903
        %1065 = vst [vmem:[%s257 + $0x80] sm:$0xff] %v907
        %1066 = vst [vmem:[%s257 + $0x88] sm:$0xff] %v909
        %1067 = vst [vmem:[%s257 + $0x90] sm:$0xff] %v913
        %1068 = vst [vmem:[%s257 + $0x98] sm:$0xff] %v915
        %1069 = vst [vmem:[%s257 + $0xa0] sm:$0xff] %v919
        %1070 = vst [vmem:[%s257 + $0xa8] sm:$0xff] %v921
        %1071 = vst [vmem:[%s257 + $0xb0] sm:$0xff] %v925
        %1072 = vst [vmem:[%s257 + $0xb8] sm:$0xff] %v927
        %1073 = vst [vmem:[%s257 + $0xc0] sm:$0xff] %v931
        %1074 = vst [vmem:[%s257 + $0xc8] sm:$0xff] %v933
        %1075 = vst [vmem:[%s257 + $0xd0] sm:$0xff] %v937
        %1076 = vst [vmem:[%s257 + $0xd8] sm:$0xff] %v939
        %1077 = vst [vmem:[%s257 + $0xe0] sm:$0xff] %v943
        %1078 = vst [vmem:[%s257 + $0xe8] sm:$0xff] %v945
        %1079 = vst [vmem:[%s257 + $0xf0] sm:$0xff] %v949
        %1080 = vst [vmem:[%s257 + $0xf8] sm:$0xff] %v951
        %1081 = vst [vmem:[%s257 + $0x100] sm:$0xff] %v955
        %1082 = vst [vmem:[%s257 + $0x108] sm:$0xff] %v957
        %1083 = vst [vmem:[%s257 + $0x110] sm:$0xff] %v961
        %1084 = vst [vmem:[%s257 + $0x118] sm:$0xff] %v963
        %1085 = vst [vmem:[%s257 + $0x120] sm:$0xff] %v967
        %1086 = vst [vmem:[%s257 + $0x128] sm:$0xff] %v969
        %1087 = vst [vmem:[%s257 + $0x130] sm:$0xff] %v973
        %1088 = vst [vmem:[%s257 + $0x138] sm:$0xff] %v975
        %1089 = vst [vmem:[%s257 + $0x140] sm:$0xff] %v979
        %1090 = vst [vmem:[%s257 + $0x148] sm:$0xff] %v981
        %1091 = vst [vmem:[%s257 + $0x150] sm:$0xff] %v985
        %1092 = vst [vmem:[%s257 + $0x158] sm:$0xff] %v987
        %1093 = vst [vmem:[%s257 + $0x160] sm:$0xff] %v991
        %1094 = vst [vmem:[%s257 + $0x168] sm:$0xff] %v993
        %1095 = vst [vmem:[%s257 + $0x170] sm:$0xff] %v997
        %1096 = vst [vmem:[%s257 + $0x178] sm:$0xff] %v999
        %1097 = vst [vmem:[%s257 + $0x180] sm:$0xff] %v1003
        %1098 = vst [vmem:[%s257 + $0x188] sm:$0xff] %v1005
        %1099 = vst [vmem:[%s257 + $0x190] sm:$0xff] %v1009
        %1100 = vst [vmem:[%s257 + $0x198] sm:$0xff] %v1011
        %1101 = vst [vmem:[%s257 + $0x1a0] sm:$0xff] %v1015
        %1102 = vst [vmem:[%s257 + $0x1a8] sm:$0xff] %v1017
        %1103 = vst [vmem:[%s257 + $0x1b0] sm:$0xff] %v1021
        %1104 = vst [vmem:[%s257 + $0x1b8] sm:$0xff] %v1023
        %1105 = vst [vmem:[%s257 + $0x1c0] sm:$0xff] %v1027
        %1106 = vst [vmem:[%s257 + $0x1c8] sm:$0xff] %v1029
        %1107 = vst [vmem:[%s257 + $0x1d0] sm:$0xff] %v1033
        %1108 = vst [vmem:[%s257 + $0x1d8] sm:$0xff] %v1035
        %1109 = vst [vmem:[%s257 + $0x1e0] sm:$0xff] %v1039
        %1110 = vst [vmem:[%s257 + $0x1e8] sm:$0xff] %v1041
        %1111 = vst [vmem:[%s257 + $0x1f0] sm:$0xff] %v1045
        %1112 = vst [vmem:[%s257 + $0x1f8] sm:$0xff] %v1047
        %s1113 = sand.u32 %s123, 1
        %s1114 = scalar_lea.sflag [#allocation4], %s1113
        %s1115 = sand.u32 %s123, 1
        %s1116 = smul.addr %s1115, 512
        %s1117 = scalar_lea.vmem [#allocation7], %s1116
        // Predicated region
        $region41: #{tpu_custom_call.1} parent=31 // pred_check
          %p1118 = pneg %p133
        $region42: #{tpu_custom_call.1} parent=31 // pred_check_branch
          %1120 = sbr.rel (%p1118) target = $region44
        $region43: #{tpu_custom_call.1} parent=31 // pred_region
          %s1121 = smul.u32 32, %s27
          %s1122 = smul.u32 2, %s28
          %s1124 = ssub.s32 8192, 8192
          %1125 = vsyncadd %s1114, %s1124
          %s1126 = smul.addr %s1121, 4
          %s1127 = sadd.s32 %s1122, %s1126
          %s1128 = smul.addr %s1127, 128
          %s1129 = scalar_lea.hbm %s3, %s1128
          %s1130 = sshll.u32 %s1117, 4
          %s1131 = int_to_ptr.vmem [resolvable:$true] %s1130
          %1136 = dma.vmem_to_hbm [thread:$0]  %s1131, 8192, %s1129, %s1114, 256, 512, 16
        $region44: #{tpu_custom_call.1} parent=31 // pred_fallthru
          _
      $region32: #{tpu_custom_call.1} parent=5 // pred_fallthru
        _
      %p1137 = scmp.le.s32.totalorder 2, %s18
      // Predicated region
      $region45: #{tpu_custom_call.1} parent=5 // pred_check
        %p1138 = pneg %p1137
      $region46: #{tpu_custom_call.1} parent=5 // pred_check_branch
        %1140 = sbr.rel (%p1138) target = $region48
      $region47: #{tpu_custom_call.1} parent=5 // pred_region
        %s1141 = ssub.s32 %s18, 2
        // Predicated region
        $region49: #{tpu_custom_call.1} parent=47 // pred_check
          %p1142 = pneg %p139
        $region50: #{tpu_custom_call.1} parent=47 // pred_check_branch
          %1144 = sbr.rel (%p1142) target = $region52
        $region51: #{tpu_custom_call.1} parent=47 // pred_region
          %s1145 = sand.u32 %s124, 1
          %s1146 = scalar_lea.sflag [#allocation4], %s1145
          %s1147 = sand.u32 %s124, 1
          %s1148 = smul.addr %s1147, 512
          %s1149 = scalar_lea.vmem [#allocation7], %s1148
          %1150 = dma.done %s1146, 8192
        $region52: #{tpu_custom_call.1} parent=47 // pred_fallthru
          _
      $region48: #{tpu_custom_call.1} parent=5 // pred_fallthru
        _
    $region6: #{tpu_custom_call.1} parent=1 // loop_footer
      %s22 = sadd.s32 1, %s18
    $region7: #{tpu_custom_call.1} parent=1 // loop_footer_branch
      %17 = sbr.rel target = $region3
    $region8: #{tpu_custom_call.1} parent=1 // loop_exit
      _
    %1151 = vsyncpa [#allocation3], 1
    %s1152 = scalar_lea.sflag [#allocation3], 1
    %1153 = vsyncpa %s1152, 1
    %1154 = vsyncpa [#allocation6], 1
    %s1155 = scalar_lea.sflag [#allocation6], 1
    %1156 = vsyncpa %s1155, 1
    %1157 = vsyncpa [#allocation4], 1
    %s1158 = scalar_lea.sflag [#allocation4], 1
    %1159 = vsyncpa %s1158, 1

</llo_original>
